<compile_context>
chip_gen: v5e
topology: v5e:2x2
jax: 0.10.0
libtpu: 0.0.40
codegen_flags: <defaults>
</compile_context>

<pallas_src>
import jax
import jax.numpy as jnp
from jax.experimental import pallas as pl
from jax.experimental.pallas import tpu as pltpu


def _round_up(x, m):
    return (x + m - 1) // m * m


# ----------------------------------------------------------------------------
# Kernel
# ----------------------------------------------------------------------------
def _make_product_kernel(mode, field_num, embed_dim, shared, mm_dtype):
    """Fused ProductLayer kernel for a static mode / shape / sharing config."""
    F, E = field_num, embed_dim
    mm_dtype = jnp.dtype(mm_dtype)

    def body(z_f32, s_f32, w_ref, b_ref, o_ref):
        tm = s_f32.shape[0]
        s3 = s_f32.reshape(tm, F, E)
        if mode == "in":
            # p[b, f, g] = sum_e S[b,f,e] * S[b,g,e]  (f32 accumulation)
            p = jnp.einsum("bfe,bge->bfg", s3, s3,
                           preferred_element_type=jnp.float32)      # (tm, F, F)
            p_flat = p.reshape(tm, F * F)                            # lane-flat slab
        else:  # mode == "out"
            fsum = jnp.sum(s3, axis=1)                               # (tm, E)
            p_flat = (fsum[:, :, None] * fsum[:, None, :]).reshape(tm, E * E)

        # Single MXU matmul: [z | p] @ [W_z ; W_p], K = F*E + P.
        x = jnp.concatenate([z_f32, p_flat], axis=1)                 # (tm, F*E + P)
        if mm_dtype != jnp.dtype(jnp.float32):
            x = x.astype(mm_dtype)                                   # bf16 MXU operand only
        acc = jnp.dot(x, w_ref[...], preferred_element_type=jnp.float32)

        # Lane-dense (tm, H_pad) store, f32 epilogue.
        o_ref[...] = (acc + b_ref[...].astype(jnp.float32)).astype(o_ref.dtype)

    if shared:
        def kernel(s_ref, w_ref, b_ref, o_ref):
            s_f32 = s_ref[...].astype(jnp.float32)
            body(s_f32, s_f32, w_ref, b_ref, o_ref)
    else:
        def kernel(z_ref, s_ref, w_ref, b_ref, o_ref):
            body(z_ref[...].astype(jnp.float32),
                 s_ref[...].astype(jnp.float32), w_ref, b_ref, o_ref)
    return kernel


# ----------------------------------------------------------------------------
# Wrapper
# ----------------------------------------------------------------------------
def _choose_tm(batch):
    """Batch-tile size: multiple of 8, <=512 rows, >=2 blocks when batch >= 16."""
    if batch <= 8:
        return max(batch, 1)
    half = -(-batch // 2)                       # at least 2 blocks (v7x dual TC)
    return max(8, min(512, _round_up(half, 8)))


def product_layer_forward(z, sparse_embeds, w_cat, bias2, *, mode, hidden,
                          compute_dtype=jnp.float32):
    """Fused ProductLayer forward.  Returns (B, hidden) float32."""
    B, F, E = sparse_embeds.shape
    K, H_pad = w_cat.shape
    FE = F * E
    compute_dtype = jnp.dtype(compute_dtype)

    # Dedup: in PNN, z IS the stacked embeddings -> DMA it once.
    shared = z is sparse_embeds

    s_flat = sparse_embeds.reshape(B, FE)
    if s_flat.dtype != compute_dtype:
        s_flat = s_flat.astype(compute_dtype)
    inputs = [s_flat]
    if not shared:
        z_flat = z.reshape(B, FE)
        if z_flat.dtype != compute_dtype:
            z_flat = z_flat.astype(compute_dtype)
        inputs = [z_flat, s_flat]

    tm = _choose_tm(B)
    n_blocks = pl.cdiv(B, tm)
    Bp = n_blocks * tm
    if Bp != B:
        # Ragged batch: zero-pad (padded rows -> bias-only outputs, sliced off).
        inputs = [jnp.pad(a, ((0, Bp - B), (0, 0))) for a in inputs]

    data_specs = [pl.BlockSpec((tm, FE), lambda i: (i, 0)) for _ in inputs]
    # Constant index_map -> weights/bias DMA'd once, VMEM-resident across tiles.
    # TODO(synk): for production-size weights on v7x (32 MiB scoped VMEM) add
    # pipeline_mode=pl.Buffered(1) here (or a K-reduction grid axis + f32 scratch).
    weight_specs = [pl.BlockSpec((K, H_pad), lambda i: (0, 0)),
                    pl.BlockSpec((1, H_pad), lambda i: (0, 0))]

    itemsize = compute_dtype.itemsize
    w_itemsize = jnp.dtype(w_cat.dtype).itemsize
    flops = int(2 * Bp * K * H_pad + 2 * Bp * FE * max(F, E))
    bytes_accessed = int(len(inputs) * Bp * FE * itemsize
                         + (K + 1) * H_pad * w_itemsize
                         + Bp * H_pad * 4)
    est_vmem = (2 * (len(inputs) * tm * FE * itemsize + tm * H_pad * 4)
                + 2 * (K + 1) * H_pad * w_itemsize)
    vmem_limit = int(min(max(4 * est_vmem, 16 << 20), 40 << 20))

    kernel = _make_product_kernel(mode, F, E, shared, compute_dtype)
    out = pl.pallas_call(
        kernel,
        out_shape=jax.ShapeDtypeStruct((Bp, H_pad), jnp.float32),
        grid_spec=pltpu.PrefetchScalarGridSpec(
            num_scalar_prefetch=0,
            grid=(n_blocks,),
            in_specs=data_specs + weight_specs,
            out_specs=pl.BlockSpec((tm, H_pad), lambda i: (i, 0)),
        ),
        compiler_params=pltpu.CompilerParams(
            dimension_semantics=("parallel",),
            vmem_limit_bytes=vmem_limit),
        cost_estimate=pl.CostEstimate(flops=flops, transcendentals=0,
                                      bytes_accessed=bytes_accessed),
    )(*inputs, w_cat, bias2)

    return out[:B, :hidden]


class ProductLayerPallas:
    """JAX/Pallas port of the PyTorch ProductLayer."""

    def __init__(self, mode, embed_dim, field_num, hidden_units,
                 key=jax.random.PRNGKey(0), compute_dtype=jnp.float32):
        assert mode in ("in", "out")
        self.mode = mode
        self.embed_dim = embed_dim
        self.field_num = field_num
        H = hidden_units[0]
        self.hidden = H
        self.compute_dtype = jnp.dtype(compute_dtype)

        kz, kp, kb = jax.random.split(key, 3)
        # torch.rand -> U[0, 1)
        self.w_z = jax.random.uniform(kz, (field_num, embed_dim, H), jnp.float32)
        if mode == "in":
            self.w_p = jax.random.uniform(kp, (field_num, field_num, H), jnp.float32)
        else:
            self.w_p = jax.random.uniform(kp, (embed_dim, embed_dim, H), jnp.float32)
        self.l_b = jax.random.uniform(kb, (H,), jnp.float32)

        # Hoisted one-time weight prep (matches torch's permute+reshape+T):
        #   W_flat[(a*dim2 + b), h] == w[a, b, h]
        # Concatenate W_z and W_p along K so the kernel does ONE matmul, and
        # zero-pad H to a multiple of 128 for lane-dense MXU/N and output stores.
        H_pad = _round_up(H, 128)
        w_z_flat = self.w_z.reshape(field_num * embed_dim, H)
        w_p_flat = self.w_p.reshape(-1, H)
        w_cat = jnp.concatenate([w_z_flat, w_p_flat], axis=0)          # (F*E + P, H)
        bias = self.l_b.reshape(1, H)
        if H_pad != H:
            w_cat = jnp.pad(w_cat, ((0, 0), (0, H_pad - H)))
            bias = jnp.pad(bias, ((0, 0), (0, H_pad - H)))
        if self.compute_dtype != jnp.dtype(jnp.float32):
            w_cat = w_cat.astype(self.compute_dtype)                   # bf16 MXU operand
        self.w_cat = w_cat
        self.bias2 = bias                                               # f32 epilogue bias

    def __call__(self, z, sparse_embeds):
        return product_layer_forward(
            z, sparse_embeds, self.w_cat, self.bias2,
            mode=self.mode, hidden=self.hidden,
            compute_dtype=self.compute_dtype)


# ----------------------------------------------------------------------------
# Pure-JAX reference (direct transcription of the torch forward).
# ----------------------------------------------------------------------------
def _reference(z, s, w_z, w_p, l_b, mode):
    B = z.shape[0]
    H = w_z.shape[2]
    l_z = z.reshape(B, -1) @ jnp.transpose(w_z, (2, 0, 1)).reshape(H, -1).T
    if mode == "in":
        p = jnp.matmul(s, jnp.transpose(s, (0, 2, 1)))
    else:
        f_sum = jnp.sum(s, axis=1, keepdims=True)
        p = jnp.matmul(jnp.transpose(f_sum, (0, 2, 1)), f_sum)
    l_p = p.reshape(B, -1) @ jnp.transpose(w_p, (2, 0, 1)).reshape(H, -1).T
    return l_p + l_z + l_b


if __name__ == "__main__":
    batch = 8
    field_num = 8
    embed_dim = 8
    hidden_units = [32, 16]  # ProductLayer only uses hidden_units[0]

    key = jax.random.PRNGKey(0)
    k_in, k_out, k_x, k_z = jax.random.split(key, 4)

    sparse_embeds = jax.random.normal(k_x, (batch, field_num, embed_dim),
                                      dtype=jnp.float32)
    z_other = jax.random.normal(k_z, (batch, field_num, embed_dim),
                                dtype=jnp.float32)

    ok = True
    # mode='in' exercises the deduped path (z IS sparse_embeds, as in PNN);
    # mode='out' exercises the separate-z path.
    for mode, k_model, z in (("in", k_in, sparse_embeds),
                             ("out", k_out, z_other)):
        model = ProductLayerPallas(mode, embed_dim, field_num, hidden_units,
                                   key=k_model)
        out = jax.block_until_ready(model(z, sparse_embeds))

        ref = _reference(z, sparse_embeds, model.w_z, model.w_p, model.l_b, mode)
        assert out.shape == (batch, hidden_units[0])
        ok &= bool(jnp.allclose(out, ref, atol=1e-3, rtol=1e-4))

    assert ok
    print("KERNEL_OK")
</pallas_src>

<mosaic_0001>
module attributes {stable_mosaic.version = 11 : i64} {
  func.func @kernel(%arg0: i32, %arg1: memref<8x64xf32, #tpu.memory_space<vmem>>, %arg2: memref<128x128xf32, #tpu.memory_space<vmem>>, %arg3: memref<1x128xf32, #tpu.memory_space<vmem>>, %arg4: memref<8x128xf32, #tpu.memory_space<vmem>>) attributes {dimension_semantics = [#tpu.dimension_semantics<parallel>], iteration_bounds = array<i64: 1>, scalar_prefetch = 0 : i64, scratch_operands = 0 : i64, tpu.core_type = #tpu.core_type<tc>, window_params = [{transform_indices = @transform_0, window_bounds = array<i64: 8, 64>}, {pipeline_mode = #tpu.pipeline_mode<synchronous>, transform_indices = @transform_1, window_bounds = array<i64: 128, 128>}, {pipeline_mode = #tpu.pipeline_mode<synchronous>, transform_indices = @transform_2, window_bounds = array<i64: 1, 128>}, {transform_indices = @transform_3, window_bounds = array<i64: 8, 128>}]} {
    %c0 = arith.constant 0 : index
    %c0_0 = arith.constant 0 : index
    %0 = vector.load %arg1[%c0, %c0_0] : memref<8x64xf32, #tpu.memory_space<vmem>>, vector<8x64xf32>
    %1 = vector.shape_cast %0 : vector<8x64xf32> to vector<8x8x8xf32>
    "tpu.trace_start"() <{level = 10 : i32, message = "bfe,bge->bfg"}> : () -> ()
    %cst = arith.constant dense<0.000000e+00> : vector<8x8x8xf32>
    %2 = tpu.matmul %1, %1, %cst {dimension_numbers = #tpu.dot_dimension_numbers<[2], [2], [1], [1], [0, 0, 0, 1, 1, 1], [0], [0]>} : vector<8x8x8xf32>, vector<8x8x8xf32>, vector<8x8x8xf32> -> vector<8x8x8xf32>
    "tpu.trace_stop"() : () -> ()
    %3 = vector.shape_cast %2 : vector<8x8x8xf32> to vector<8x64xf32>
    %4 = tpu.concatenate %0, %3 in 1 : vector<8x64xf32>, vector<8x64xf32> -> vector<8x128xf32>
    %c0_1 = arith.constant 0 : index
    %c0_2 = arith.constant 0 : index
    %5 = vector.load %arg2[%c0_1, %c0_2] : memref<128x128xf32, #tpu.memory_space<vmem>>, vector<128x128xf32>
    %cst_3 = arith.constant dense<0.000000e+00> : vector<8x128xf32>
    %6 = tpu.matmul %4, %5, %cst_3 {dimension_numbers = #tpu.dot_dimension_numbers<[1], [0], [0], [1], [0, 0, 1, 1], [], []>} : vector<8x128xf32>, vector<128x128xf32>, vector<8x128xf32> -> vector<8x128xf32>
    %c0_4 = arith.constant 0 : index
    %c0_5 = arith.constant 0 : index
    %7 = vector.load %arg3[%c0_4, %c0_5] : memref<1x128xf32, #tpu.memory_space<vmem>>, vector<1x128xf32>
    %8 = vector.broadcast %7 : vector<1x128xf32> to vector<8x128xf32>
    %9 = arith.addf %6, %8 : vector<8x128xf32>
    %c0_6 = arith.constant 0 : index
    %c0_7 = arith.constant 0 : index
    %10 = vector.load %arg4[%c0_6, %c0_7] : memref<8x128xf32, #tpu.memory_space<vmem>>, vector<8x128xf32>
    tpu.vector_store %arg4[%c0_6, %c0_7], %9 {strides = array<i32>} : memref<8x128xf32, #tpu.memory_space<vmem>>, vector<8x128xf32>,
    return
  }
  func.func @transform_0(%arg0: i32) -> (i32, i32) {
    %c0_i32 = arith.constant 0 : i32
    %c0_i32_0 = arith.constant 0 : i32
    return %arg0, %c0_i32 : i32, i32
  }
  func.func @transform_1(%arg0: i32) -> (i32, i32) {
    %c0_i32 = arith.constant 0 : i32
    %c0_i32_0 = arith.constant 0 : i32
    %c0_i32_1 = arith.constant 0 : i32
    return %c0_i32, %c0_i32_0 : i32, i32
  }
  func.func @transform_2(%arg0: i32) -> (i32, i32) {
    %c0_i32 = arith.constant 0 : i32
    %c0_i32_0 = arith.constant 0 : i32
    %c0_i32_1 = arith.constant 0 : i32
    return %c0_i32, %c0_i32_0 : i32, i32
  }
  func.func @transform_3(%arg0: i32) -> (i32, i32) {
    %c0_i32 = arith.constant 0 : i32
    %c0_i32_0 = arith.constant 0 : i32
    return %arg0, %c0_i32 : i32, i32
  }
}

</mosaic_0001>

<llo_original>
// kernel: tpu_custom_call.1
$region0: #{tpu_custom_call.1}
  #allocation0 [shape = 'u32[]', space=smem, size = 0x4, offset = 0x4, fixed_abs, tag = 'smem constant byte address 0x4 - core index']
  #allocation1 [shape = 'u32[72,128]{1,0:T(1,128)}', space=vmem, size = 0x9000, scoped, tag = 'internal scratch']
  %s0 = inlined_call_operand.hbm [shape: f32[8,64], index: 0, kind: input, shape index: {}]
  %s1 = inlined_call_operand.hbm [shape: f32[128,128], index: 1, kind: input, shape index: {}]
  %s2 = inlined_call_operand.vmem [shape: f32[1,128], index: 2, kind: input, shape index: {}]
  %s3 = inlined_call_operand.hbm [shape: f32[8,128], index: 3, kind: output, shape index: {}]
  %s4 = sld [smem:[#allocation0]]
  $region30: #{tpu_custom_call.1} parent=0
    _
  %s6 = ssub.s32 1, %s4
  %s7 = scalar_select 0, %s6, %s4
  $region1: #{tpu_custom_call.1} parent=0
    #allocation2 [shape = 'u8[4096]{0}', space=vmem, size = 0x1000, scoped, tag = 'input window, operand 0, single buffered']
    #allocation3 [shape = 's32[1]{0}', space=sflag, size = 0x4, scoped, tag = 'scoped memory for tpu_custom_call.1']
    #allocation4 [shape = 's32[1]{0}', space=sflag, size = 0x4, scoped, tag = 'scoped memory for tpu_custom_call.1']
    #allocation5 [shape = 'u8[65536]{0}', space=vmem, size = 0x10000, scoped, tag = 'input window, operand 1, single buffered']
    #allocation6 [shape = 's32[1]{0}', space=sflag, size = 0x4, scoped, tag = 'scoped memory for tpu_custom_call.1']
    #allocation7 [shape = 'u8[4096]{0}', space=vmem, size = 0x1000, scoped, tag = 'output window, operand 0, single buffered']
    %8 = vsyncpa [#allocation3], 0
    %9 = vsyncpa [#allocation6], 0
    %10 = vsyncpa [#allocation4], 0
    // Predicated region
    $region2: #{tpu_custom_call.1} parent=1 // pred_check
      _
    $region3: #{tpu_custom_call.1} parent=1 // pred_check_branch
      %12 = sbr.rel (0) target = $region5
    $region4: #{tpu_custom_call.1} parent=1 // pred_region
      %14 = vsyncadd [#allocation3], 0
      %s16 = sshll.u32 %s0, 4
      %s17 = int_to_ptr.hbm [resolvable:$true] %s16
      %s18 = sshll.u32 [#allocation2], 4
      %s19 = int_to_ptr.vmem [resolvable:$true] %s18
      %21 = dma.hbm_to_vmem [thread:$0]  %s17, 128, %s19, [#allocation3]
    $region5: #{tpu_custom_call.1} parent=1 // pred_fallthru
      _
    // Predicated region
    $region6: #{tpu_custom_call.1} parent=1 // pred_check
      _
    $region7: #{tpu_custom_call.1} parent=1 // pred_check_branch
      %23 = sbr.rel (0) target = $region9
    $region8: #{tpu_custom_call.1} parent=1 // pred_region
      %25 = vsyncadd [#allocation6], 0
      %s26 = sshll.u32 %s1, 4
      %s27 = int_to_ptr.hbm [resolvable:$true] %s26
      %s28 = sshll.u32 [#allocation5], 4
      %s29 = int_to_ptr.vmem [resolvable:$true] %s28
      %34 = dma.hbm_to_vmem [thread:$0]  %s27, 2048, %s29, [#allocation6], 128, 128, 8
    $region9: #{tpu_custom_call.1} parent=1 // pred_fallthru
      _
    // Predicated region
    $region10: #{tpu_custom_call.1} parent=1 // pred_check
      _
    $region11: #{tpu_custom_call.1} parent=1 // pred_check_branch
      %36 = sbr.rel (0) target = $region13
    $region12: #{tpu_custom_call.1} parent=1 // pred_region
      _
    $region13: #{tpu_custom_call.1} parent=1 // pred_fallthru
      _
    // Predicated region
    $region14: #{tpu_custom_call.1} parent=1 // pred_check
      _
    $region15: #{tpu_custom_call.1} parent=1 // pred_check_branch
      %38 = sbr.rel (0) target = $region17
    $region16: #{tpu_custom_call.1} parent=1 // pred_region
      %40 = dma.done [#allocation3], 128
    $region17: #{tpu_custom_call.1} parent=1 // pred_fallthru
      _
    // Predicated region
    $region18: #{tpu_custom_call.1} parent=1 // pred_check
      _
    $region19: #{tpu_custom_call.1} parent=1 // pred_check_branch
      %42 = sbr.rel (0) target = $region21
    $region20: #{tpu_custom_call.1} parent=1 // pred_region
      %44 = dma.done [#allocation6], 2048
    $region21: #{tpu_custom_call.1} parent=1 // pred_fallthru
      _
    %v45 = vld [vmem:[#allocation2] sm:$0xff]
    %47 = vrot.lane.b32.xlu0 %v45, 120
    %v48 = vpop.permute.xlu0 %47
    %50 = vrot.lane.b32.xlu0 %v45, 112
    %v51 = vpop.permute.xlu0 %50
    %53 = vrot.lane.b32.xlu0 %v45, 104
    %v54 = vpop.permute.xlu0 %53
    %56 = vrot.lane.b32.xlu0 %v45, 96
    %v57 = vpop.permute.xlu0 %56
    %59 = vrot.lane.b32.xlu0 %v45, 88
    %v60 = vpop.permute.xlu0 %59
    %62 = vrot.lane.b32.xlu0 %v45, 80
    %v63 = vpop.permute.xlu0 %62
    %65 = vrot.lane.b32.xlu0 %v45, 72
    %v66 = vpop.permute.xlu0 %65
    %v68 = vrot.slane %v51, 4
    %vm69 = vcmask 1047556
    %v70 = vsel %vm69, %v68, %v45
    %v71 = vrot.slane %v45, 4
    %v72 = vsel %vm69, %v51, %v71
    %v74 = vunpack.c.l.s4 1983009808
    %v75 = vunpack.c.0.s8 %v74
    %v76 = vperm.slane %v70, %v75
    %v78 = vunpack.c.l.s4 1983009808
    %v79 = vunpack.c.0.s8 %v78
    %v80 = vperm.slane %v72, %v79
    %v81 = vrot.slane %v54, 4
    %v82 = vsel %vm69, %v81, %v48
    %v83 = vrot.slane %v48, 4
    %v84 = vsel %vm69, %v54, %v83
    %v86 = vunpack.c.l.s4 1983009808
    %v87 = vunpack.c.0.s8 %v86
    %v88 = vperm.slane %v82, %v87
    %v90 = vunpack.c.l.s4 1983009808
    %v91 = vunpack.c.0.s8 %v90
    %v92 = vperm.slane %v84, %v91
    %v93 = vrot.slane %v63, 4
    %v94 = vsel %vm69, %v93, %v57
    %v95 = vrot.slane %v57, 4
    %v96 = vsel %vm69, %v63, %v95
    %v98 = vunpack.c.l.s4 1983009808
    %v99 = vunpack.c.0.s8 %v98
    %v100 = vperm.slane %v94, %v99
    %v102 = vunpack.c.l.s4 1983009808
    %v103 = vunpack.c.0.s8 %v102
    %v104 = vperm.slane %v96, %v103
    %v105 = vrot.slane %v66, 4
    %v106 = vsel %vm69, %v105, %v60
    %v107 = vrot.slane %v60, 4
    %v108 = vsel %vm69, %v66, %v107
    %v110 = vunpack.c.l.s4 1983009808
    %v111 = vunpack.c.0.s8 %v110
    %v112 = vperm.slane %v106, %v111
    %v114 = vunpack.c.l.s4 1983009808
    %v115 = vunpack.c.0.s8 %v114
    %v116 = vperm.slane %v108, %v115
    %v117 = vrot.slane %v88, 4
    %v118 = vsel %vm69, %v117, %v76
    %v119 = vrot.slane %v76, 4
    %v120 = vsel %vm69, %v88, %v119
    %v122 = vunpack.c.l.s4 1934713408
    %v123 = vunpack.c.0.s8 %v122
    %v124 = vperm.slane %v118, %v123
    %v126 = vunpack.c.l.s4 1934713408
    %v127 = vunpack.c.0.s8 %v126
    %v128 = vperm.slane %v120, %v127
    %v129 = vrot.slane %v92, 4
    %v130 = vsel %vm69, %v129, %v80
    %v131 = vrot.slane %v80, 4
    %v132 = vsel %vm69, %v92, %v131
    %v134 = vunpack.c.l.s4 1934713408
    %v135 = vunpack.c.0.s8 %v134
    %v136 = vperm.slane %v130, %v135
    %v138 = vunpack.c.l.s4 1934713408
    %v139 = vunpack.c.0.s8 %v138
    %v140 = vperm.slane %v132, %v139
    %v141 = vrot.slane %v112, 4
    %v142 = vsel %vm69, %v141, %v100
    %v143 = vrot.slane %v100, 4
    %v144 = vsel %vm69, %v112, %v143
    %v146 = vunpack.c.l.s4 1934713408
    %v147 = vunpack.c.0.s8 %v146
    %v148 = vperm.slane %v142, %v147
    %v150 = vunpack.c.l.s4 1934713408
    %v151 = vunpack.c.0.s8 %v150
    %v152 = vperm.slane %v144, %v151
    %v153 = vrot.slane %v116, 4
    %v154 = vsel %vm69, %v153, %v104
    %v155 = vrot.slane %v104, 4
    %v156 = vsel %vm69, %v116, %v155
    %v158 = vunpack.c.l.s4 1934713408
    %v159 = vunpack.c.0.s8 %v158
    %v160 = vperm.slane %v154, %v159
    %v162 = vunpack.c.l.s4 1934713408
    %v163 = vunpack.c.0.s8 %v162
    %v164 = vperm.slane %v156, %v163
    %v165 = vrot.slane %v148, 4
    %v166 = vsel %vm69, %v165, %v124
    %v167 = vrot.slane %v124, 4
    %v168 = vsel %vm69, %v148, %v167
    %v169 = vrot.slane %v152, 4
    %v170 = vsel %vm69, %v169, %v128
    %v171 = vrot.slane %v128, 4
    %v172 = vsel %vm69, %v152, %v171
    %v173 = vrot.slane %v160, 4
    %v174 = vsel %vm69, %v173, %v136
    %v175 = vrot.slane %v136, 4
    %v176 = vsel %vm69, %v160, %v175
    %v177 = vrot.slane %v164, 4
    %v178 = vsel %vm69, %v177, %v140
    %v179 = vrot.slane %v140, 4
    %v180 = vsel %vm69, %v164, %v179
    %vm181 = vcmask 64512
    %v183 = vsel %vm181, %v166, 0
    %185 = vmatpush.xpose.msra.mxu0 0.0
    %186 = vmatpush.xpose.msra.mxu0 0.0
    %187 = vmatpush.xpose.msra.mxu0 0.0
    %188 = vmatpush.xpose.msra.mxu0 0.0
    %189 = vmatpush.xpose.msra.mxu0 0.0
    %190 = vmatpush.xpose.msra.mxu0 0.0
    %191 = vmatpush.xpose.msra.mxu0 0.0
    %192 = vmatpush.xpose.msra.mxu0 0.0
    %193 = vmatpush.xpose.msra.mxu0 0.0
    %194 = vmatpush.xpose.msra.mxu0 0.0
    %195 = vmatpush.xpose.msra.mxu0 0.0
    %196 = vmatpush.xpose.msra.mxu0 0.0
    %197 = vmatpush.xpose.msra.mxu0 0.0
    %198 = vmatpush.xpose.msra.mxu0 0.0
    %199 = vmatpush.xpose.msra.mxu0 0.0
    %200 = vmatpush.xpose.msra.mxu0 %v183
    %201 = vmatmul.f32.gmra.mxu0 %v183
    %v202 = vpop.f32.mrf.mxu0
    %v203 = vadd.f32 0.0, %v202
    %204 = vdwg.mxu0
    %v206 = vsel %vm181, %v168, 0
    %208 = vmatpush.xpose.msra.mxu0 0.0
    %209 = vmatpush.xpose.msra.mxu0 0.0
    %210 = vmatpush.xpose.msra.mxu0 0.0
    %211 = vmatpush.xpose.msra.mxu0 0.0
    %212 = vmatpush.xpose.msra.mxu0 0.0
    %213 = vmatpush.xpose.msra.mxu0 0.0
    %214 = vmatpush.xpose.msra.mxu0 0.0
    %215 = vmatpush.xpose.msra.mxu0 0.0
    %216 = vmatpush.xpose.msra.mxu0 0.0
    %217 = vmatpush.xpose.msra.mxu0 0.0
    %218 = vmatpush.xpose.msra.mxu0 0.0
    %219 = vmatpush.xpose.msra.mxu0 0.0
    %220 = vmatpush.xpose.msra.mxu0 0.0
    %221 = vmatpush.xpose.msra.mxu0 0.0
    %222 = vmatpush.xpose.msra.mxu0 0.0
    %223 = vmatpush.xpose.msra.mxu0 %v206
    %224 = vmatmul.f32.gmra.mxu0 %v206
    %v225 = vpop.f32.mrf.mxu0
    %v226 = vadd.f32 0.0, %v225
    %227 = vdwg.mxu0
    %v229 = vsel %vm181, %v170, 0
    %231 = vmatpush.xpose.msra.mxu0 0.0
    %232 = vmatpush.xpose.msra.mxu0 0.0
    %233 = vmatpush.xpose.msra.mxu0 0.0
    %234 = vmatpush.xpose.msra.mxu0 0.0
    %235 = vmatpush.xpose.msra.mxu0 0.0
    %236 = vmatpush.xpose.msra.mxu0 0.0
    %237 = vmatpush.xpose.msra.mxu0 0.0
    %238 = vmatpush.xpose.msra.mxu0 0.0
    %239 = vmatpush.xpose.msra.mxu0 0.0
    %240 = vmatpush.xpose.msra.mxu0 0.0
    %241 = vmatpush.xpose.msra.mxu0 0.0
    %242 = vmatpush.xpose.msra.mxu0 0.0
    %243 = vmatpush.xpose.msra.mxu0 0.0
    %244 = vmatpush.xpose.msra.mxu0 0.0
    %245 = vmatpush.xpose.msra.mxu0 0.0
    %246 = vmatpush.xpose.msra.mxu0 %v229
    %247 = vmatmul.f32.gmra.mxu0 %v229
    %v248 = vpop.f32.mrf.mxu0
    %v249 = vadd.f32 0.0, %v248
    %250 = vdwg.mxu0
    %v252 = vsel %vm181, %v172, 0
    %254 = vmatpush.xpose.msra.mxu0 0.0
    %255 = vmatpush.xpose.msra.mxu0 0.0
    %256 = vmatpush.xpose.msra.mxu0 0.0
    %257 = vmatpush.xpose.msra.mxu0 0.0
    %258 = vmatpush.xpose.msra.mxu0 0.0
    %259 = vmatpush.xpose.msra.mxu0 0.0
    %260 = vmatpush.xpose.msra.mxu0 0.0
    %261 = vmatpush.xpose.msra.mxu0 0.0
    %262 = vmatpush.xpose.msra.mxu0 0.0
    %263 = vmatpush.xpose.msra.mxu0 0.0
    %264 = vmatpush.xpose.msra.mxu0 0.0
    %265 = vmatpush.xpose.msra.mxu0 0.0
    %266 = vmatpush.xpose.msra.mxu0 0.0
    %267 = vmatpush.xpose.msra.mxu0 0.0
    %268 = vmatpush.xpose.msra.mxu0 0.0
    %269 = vmatpush.xpose.msra.mxu0 %v252
    %270 = vmatmul.f32.gmra.mxu0 %v252
    %v271 = vpop.f32.mrf.mxu0
    %v272 = vadd.f32 0.0, %v271
    %273 = vdwg.mxu0
    %v275 = vsel %vm181, %v174, 0
    %277 = vmatpush.xpose.msra.mxu0 0.0
    %278 = vmatpush.xpose.msra.mxu0 0.0
    %279 = vmatpush.xpose.msra.mxu0 0.0
    %280 = vmatpush.xpose.msra.mxu0 0.0
    %281 = vmatpush.xpose.msra.mxu0 0.0
    %282 = vmatpush.xpose.msra.mxu0 0.0
    %283 = vmatpush.xpose.msra.mxu0 0.0
    %284 = vmatpush.xpose.msra.mxu0 0.0
    %285 = vmatpush.xpose.msra.mxu0 0.0
    %286 = vmatpush.xpose.msra.mxu0 0.0
    %287 = vmatpush.xpose.msra.mxu0 0.0
    %288 = vmatpush.xpose.msra.mxu0 0.0
    %289 = vmatpush.xpose.msra.mxu0 0.0
    %290 = vmatpush.xpose.msra.mxu0 0.0
    %291 = vmatpush.xpose.msra.mxu0 0.0
    %292 = vmatpush.xpose.msra.mxu0 %v275
    %293 = vmatmul.f32.gmra.mxu0 %v275
    %v294 = vpop.f32.mrf.mxu0
    %v295 = vadd.f32 0.0, %v294
    %296 = vdwg.mxu0
    %v298 = vsel %vm181, %v176, 0
    %300 = vmatpush.xpose.msra.mxu0 0.0
    %301 = vmatpush.xpose.msra.mxu0 0.0
    %302 = vmatpush.xpose.msra.mxu0 0.0
    %303 = vmatpush.xpose.msra.mxu0 0.0
    %304 = vmatpush.xpose.msra.mxu0 0.0
    %305 = vmatpush.xpose.msra.mxu0 0.0
    %306 = vmatpush.xpose.msra.mxu0 0.0
    %307 = vmatpush.xpose.msra.mxu0 0.0
    %308 = vmatpush.xpose.msra.mxu0 0.0
    %309 = vmatpush.xpose.msra.mxu0 0.0
    %310 = vmatpush.xpose.msra.mxu0 0.0
    %311 = vmatpush.xpose.msra.mxu0 0.0
    %312 = vmatpush.xpose.msra.mxu0 0.0
    %313 = vmatpush.xpose.msra.mxu0 0.0
    %314 = vmatpush.xpose.msra.mxu0 0.0
    %315 = vmatpush.xpose.msra.mxu0 %v298
    %316 = vmatmul.f32.gmra.mxu0 %v298
    %v317 = vpop.f32.mrf.mxu0
    %v318 = vadd.f32 0.0, %v317
    %319 = vdwg.mxu0
    %v321 = vsel %vm181, %v178, 0
    %323 = vmatpush.xpose.msra.mxu0 0.0
    %324 = vmatpush.xpose.msra.mxu0 0.0
    %325 = vmatpush.xpose.msra.mxu0 0.0
    %326 = vmatpush.xpose.msra.mxu0 0.0
    %327 = vmatpush.xpose.msra.mxu0 0.0
    %328 = vmatpush.xpose.msra.mxu0 0.0
    %329 = vmatpush.xpose.msra.mxu0 0.0
    %330 = vmatpush.xpose.msra.mxu0 0.0
    %331 = vmatpush.xpose.msra.mxu0 0.0
    %332 = vmatpush.xpose.msra.mxu0 0.0
    %333 = vmatpush.xpose.msra.mxu0 0.0
    %334 = vmatpush.xpose.msra.mxu0 0.0
    %335 = vmatpush.xpose.msra.mxu0 0.0
    %336 = vmatpush.xpose.msra.mxu0 0.0
    %337 = vmatpush.xpose.msra.mxu0 0.0
    %338 = vmatpush.xpose.msra.mxu0 %v321
    %339 = vmatmul.f32.gmra.mxu0 %v321
    %v340 = vpop.f32.mrf.mxu0
    %v341 = vadd.f32 0.0, %v340
    %342 = vdwg.mxu0
    %v344 = vsel %vm181, %v180, 0
    %346 = vmatpush.xpose.msra.mxu0 0.0
    %347 = vmatpush.xpose.msra.mxu0 0.0
    %348 = vmatpush.xpose.msra.mxu0 0.0
    %349 = vmatpush.xpose.msra.mxu0 0.0
    %350 = vmatpush.xpose.msra.mxu0 0.0
    %351 = vmatpush.xpose.msra.mxu0 0.0
    %352 = vmatpush.xpose.msra.mxu0 0.0
    %353 = vmatpush.xpose.msra.mxu0 0.0
    %354 = vmatpush.xpose.msra.mxu0 0.0
    %355 = vmatpush.xpose.msra.mxu0 0.0
    %356 = vmatpush.xpose.msra.mxu0 0.0
    %357 = vmatpush.xpose.msra.mxu0 0.0
    %358 = vmatpush.xpose.msra.mxu0 0.0
    %359 = vmatpush.xpose.msra.mxu0 0.0
    %360 = vmatpush.xpose.msra.mxu0 0.0
    %361 = vmatpush.xpose.msra.mxu0 %v344
    %362 = vmatmul.f32.gmra.mxu0 %v344
    %v363 = vpop.f32.mrf.mxu0
    %v364 = vadd.f32 0.0, %v363
    %365 = vdwg.mxu0
    %v366 = vrot.slane %v249, 4
    %v367 = vsel %vm69, %v366, %v203
    %v368 = vrot.slane %v203, 4
    %v369 = vsel %vm69, %v249, %v368
    %v371 = vunpack.c.l.s4 1983009808
    %v372 = vunpack.c.0.s8 %v371
    %v373 = vperm.slane %v367, %v372
    %v375 = vunpack.c.l.s4 1983009808
    %v376 = vunpack.c.0.s8 %v375
    %v377 = vperm.slane %v369, %v376
    %v378 = vrot.slane %v272, 4
    %v379 = vsel %vm69, %v378, %v226
    %v380 = vrot.slane %v226, 4
    %v381 = vsel %vm69, %v272, %v380
    %v383 = vunpack.c.l.s4 1983009808
    %v384 = vunpack.c.0.s8 %v383
    %v385 = vperm.slane %v379, %v384
    %v387 = vunpack.c.l.s4 1983009808
    %v388 = vunpack.c.0.s8 %v387
    %v389 = vperm.slane %v381, %v388
    %v390 = vrot.slane %v341, 4
    %v391 = vsel %vm69, %v390, %v295
    %v392 = vrot.slane %v295, 4
    %v393 = vsel %vm69, %v341, %v392
    %v395 = vunpack.c.l.s4 1983009808
    %v396 = vunpack.c.0.s8 %v395
    %v397 = vperm.slane %v391, %v396
    %v399 = vunpack.c.l.s4 1983009808
    %v400 = vunpack.c.0.s8 %v399
    %v401 = vperm.slane %v393, %v400
    %v402 = vrot.slane %v364, 4
    %v403 = vsel %vm69, %v402, %v318
    %v404 = vrot.slane %v318, 4
    %v405 = vsel %vm69, %v364, %v404
    %v407 = vunpack.c.l.s4 1983009808
    %v408 = vunpack.c.0.s8 %v407
    %v409 = vperm.slane %v403, %v408
    %v411 = vunpack.c.l.s4 1983009808
    %v412 = vunpack.c.0.s8 %v411
    %v413 = vperm.slane %v405, %v412
    %v414 = vrot.slane %v385, 4
    %v415 = vsel %vm69, %v414, %v373
    %v416 = vrot.slane %v373, 4
    %v417 = vsel %vm69, %v385, %v416
    %v419 = vunpack.c.l.s4 1934713408
    %v420 = vunpack.c.0.s8 %v419
    %v421 = vperm.slane %v415, %v420
    %v423 = vunpack.c.l.s4 1934713408
    %v424 = vunpack.c.0.s8 %v423
    %v425 = vperm.slane %v417, %v424
    %v426 = vrot.slane %v389, 4
    %v427 = vsel %vm69, %v426, %v377
    %v428 = vrot.slane %v377, 4
    %v429 = vsel %vm69, %v389, %v428
    %v431 = vunpack.c.l.s4 1934713408
    %v432 = vunpack.c.0.s8 %v431
    %v433 = vperm.slane %v427, %v432
    %v435 = vunpack.c.l.s4 1934713408
    %v436 = vunpack.c.0.s8 %v435
    %v437 = vperm.slane %v429, %v436
    %v438 = vrot.slane %v409, 4
    %v439 = vsel %vm69, %v438, %v397
    %v440 = vrot.slane %v397, 4
    %v441 = vsel %vm69, %v409, %v440
    %v443 = vunpack.c.l.s4 1934713408
    %v444 = vunpack.c.0.s8 %v443
    %v445 = vperm.slane %v439, %v444
    %v447 = vunpack.c.l.s4 1934713408
    %v448 = vunpack.c.0.s8 %v447
    %v449 = vperm.slane %v441, %v448
    %v450 = vrot.slane %v413, 4
    %v451 = vsel %vm69, %v450, %v401
    %v452 = vrot.slane %v401, 4
    %v453 = vsel %vm69, %v413, %v452
    %v455 = vunpack.c.l.s4 1934713408
    %v456 = vunpack.c.0.s8 %v455
    %v457 = vperm.slane %v451, %v456
    %v459 = vunpack.c.l.s4 1934713408
    %v460 = vunpack.c.0.s8 %v459
    %v461 = vperm.slane %v453, %v460
    %v462 = vrot.slane %v445, 4
    %v463 = vsel %vm69, %v462, %v421
    %v464 = vrot.slane %v421, 4
    %v465 = vsel %vm69, %v445, %v464
    %v466 = vrot.slane %v449, 4
    %v467 = vsel %vm69, %v466, %v425
    %v468 = vrot.slane %v425, 4
    %v469 = vsel %vm69, %v449, %v468
    %v470 = vrot.slane %v457, 4
    %v471 = vsel %vm69, %v470, %v433
    %v472 = vrot.slane %v433, 4
    %v473 = vsel %vm69, %v457, %v472
    %v474 = vrot.slane %v461, 4
    %v475 = vsel %vm69, %v474, %v437
    %v476 = vrot.slane %v437, 4
    %v477 = vsel %vm69, %v461, %v476
    %479 = vrot.lane.b32.xlu0 %v465, 8
    %v480 = vpop.permute.xlu0 %479
    %483 = vrot.lane.b32.xlu0 %v467, 16
    %v484 = vpop.permute.xlu0 %483
    %487 = vrot.lane.b32.xlu0 %v469, 24
    %v488 = vpop.permute.xlu0 %487
    %491 = vrot.lane.b32.xlu0 %v471, 32
    %v492 = vpop.permute.xlu0 %491
    %495 = vrot.lane.b32.xlu0 %v473, 40
    %v496 = vpop.permute.xlu0 %495
    %499 = vrot.lane.b32.xlu0 %v475, 48
    %v500 = vpop.permute.xlu0 %499
    %503 = vrot.lane.b32.xlu0 %v477, 56
    %v504 = vpop.permute.xlu0 %503
    %v506 = vsel %vm181, %v463, %v480
    %vm507 = vcmask 130048
    %v508 = vsel %vm507, %v506, %v484
    %vm509 = vcmask 195584
    %v510 = vsel %vm509, %v508, %v488
    %vm511 = vcmask 261120
    %v512 = vsel %vm511, %v510, %v492
    %vm513 = vcmask 326656
    %v514 = vsel %vm513, %v512, %v496
    %vm515 = vcmask 392192
    %v516 = vsel %vm515, %v514, %v500
    %vm517 = vcmask 457728
    %v518 = vsel %vm517, %v516, %v504
    %520 = vrot.lane.b32.xlu0 %v518, 64
    %v521 = vpop.permute.xlu0 %520
    %vm523 = vcmask 523264
    %v524 = vsel %vm523, %v45, %v521
    %v525 = vld [vmem:[#allocation5] sm:$0xff]
    %v526 = vld [vmem:[#allocation5 + $0x8] sm:$0xff]
    %v527 = vld [vmem:[#allocation5 + $0x10] sm:$0xff]
    %v528 = vld [vmem:[#allocation5 + $0x18] sm:$0xff]
    %v529 = vld [vmem:[#allocation5 + $0x20] sm:$0xff]
    %v530 = vld [vmem:[#allocation5 + $0x28] sm:$0xff]
    %v531 = vld [vmem:[#allocation5 + $0x30] sm:$0xff]
    %v532 = vld [vmem:[#allocation5 + $0x38] sm:$0xff]
    %v533 = vld [vmem:[#allocation5 + $0x40] sm:$0xff]
    %v534 = vld [vmem:[#allocation5 + $0x48] sm:$0xff]
    %v535 = vld [vmem:[#allocation5 + $0x50] sm:$0xff]
    %v536 = vld [vmem:[#allocation5 + $0x58] sm:$0xff]
    %v537 = vld [vmem:[#allocation5 + $0x60] sm:$0xff]
    %v538 = vld [vmem:[#allocation5 + $0x68] sm:$0xff]
    %v539 = vld [vmem:[#allocation5 + $0x70] sm:$0xff]
    %v540 = vld [vmem:[#allocation5 + $0x78] sm:$0xff]
    %v541 = vld [vmem:[%s2] sm:$0x1]
    %v543 = vperm.slane %v541, 0
    %545 = vmatpush.msra.mxu0 %v540
    %546 = vmatpush.msra.mxu0 %v539
    %547 = vmatpush.msra.mxu0 %v538
    %548 = vmatpush.msra.mxu0 %v537
    %549 = vmatpush.msra.mxu0 %v536
    %550 = vmatpush.msra.mxu0 %v535
    %551 = vmatpush.msra.mxu0 %v534
    %552 = vmatpush.msra.mxu0 %v533
    %553 = vmatpush.msra.mxu0 %v532
    %554 = vmatpush.msra.mxu0 %v531
    %555 = vmatpush.msra.mxu0 %v530
    %556 = vmatpush.msra.mxu0 %v529
    %557 = vmatpush.msra.mxu0 %v528
    %558 = vmatpush.msra.mxu0 %v527
    %559 = vmatpush.msra.mxu0 %v526
    %560 = vmatpush.msra.mxu0 %v525
    %561 = vmatmul.f32.gmra.mxu0 %v524
    %v562 = vpop.f32.mrf.mxu0
    %v563 = vadd.f32 %v543, %v562
    %564 = vdwg.mxu0
    %565 = vst [vmem:[#allocation7] sm:$0xff] %v563
    // Predicated region
    $region22: #{tpu_custom_call.1} parent=1 // pred_check
      _
    $region23: #{tpu_custom_call.1} parent=1 // pred_check_branch
      %567 = sbr.rel (0) target = $region25
    $region24: #{tpu_custom_call.1} parent=1 // pred_region
      %569 = vsyncadd [#allocation4], 0
      %s571 = sshll.u32 [#allocation7], 4
      %s572 = int_to_ptr.vmem [resolvable:$true] %s571
      %s573 = sshll.u32 %s3, 4
      %s574 = int_to_ptr.hbm [resolvable:$true] %s573
      %576 = dma.vmem_to_hbm [thread:$0]  %s572, 128, %s574, [#allocation4]
    $region25: #{tpu_custom_call.1} parent=1 // pred_fallthru
      _
    // Predicated region
    $region26: #{tpu_custom_call.1} parent=1 // pred_check
      _
    $region27: #{tpu_custom_call.1} parent=1 // pred_check_branch
      %578 = sbr.rel (0) target = $region29
    $region28: #{tpu_custom_call.1} parent=1 // pred_region
      %580 = dma.done [#allocation4], 128
    $region29: #{tpu_custom_call.1} parent=1 // pred_fallthru
      _
    %581 = vsyncpa [#allocation3], 1
    %582 = vsyncpa [#allocation6], 1
    %583 = vsyncpa [#allocation4], 1

</llo_original>
